<compile_context>
chip_gen: v5e
topology: v5e:2x2
jax: 0.10.0
libtpu: 0.0.40
codegen_flags: <defaults>
</compile_context>

<pallas_src>
import numpy as np
import jax
import jax.numpy as jnp
from jax.experimental import pallas as pl
from jax.experimental.pallas import tpu as pltpu


def _single_head_kernel(x_ref, w_ref, b_ref, out_ref):
    # x_ref:   (C_in, T)      channel-major spatial tile (NCHW layout, no HBM transpose)
    # w_ref:   (C_tot, C_in)  fused [cls | box] 1x1-conv weights, pre-transposed
    # b_ref:   (C_tot, 1)     fused bias (f32)
    # out_ref: (C_tot, T)     f32, lane-dense along T
    acc = jnp.dot(w_ref[...], x_ref[...], preferred_element_type=jnp.float32)
    out_ref[...] = (acc + b_ref[...]).astype(out_ref.dtype)


def _pick_hw_tile(hw, c_in, c_tot, batch, in_itemsize, *,
                  max_tile, vmem_budget_bytes, min_programs):
    """Largest legal lane-aligned spatial tile that (a) fits the VMEM budget with
    double-buffered input/output blocks and (b) leaves >= min_programs grid steps
    (v7x megacore coverage)."""
    c_tot_pad = ((c_tot + 7) // 8) * 8
    # double-buffered x block + double-buffered fused output block, per spatial position
    per_pos = 2 * c_in * in_itemsize + 2 * c_tot_pad * 4
    fit = max(128, (vmem_budget_bytes // per_pos) // 128 * 128)
    t = min(max_tile, fit)
    # aim for >= min_programs total programs across (batch, spatial tiles)
    want_tiles = max(1, -(-min_programs // max(1, batch)))
    if hw > want_tiles * 128:
        t = min(t, 128 * (-(-hw // (want_tiles * 128))))
    if hw <= t:
        if hw < 128 or hw % 128 == 0:
            return hw                      # full-extent block is always legal
        return (hw // 128) * 128           # lane-aligned; boundary block masked by Pallas
    return max(128, (t // 128) * 128)


def single_head_forward(x_nchw, w_cls, b_cls, w_box, b_box, *,
                        compute_dtype=jnp.bfloat16,
                        max_hw_tile=8192,
                        min_programs=4,
                        vmem_budget_bytes=24 * 1024 * 1024):
    """x_nchw: (B, C_in, H, W) float32.
    w_cls: (C_in, C_cls), b_cls: (C_cls,), w_box: (C_in, C_box), b_box: (C_box,).
    Returns (cls_preds, box_preds) in NHWC layout: (B, H, W, C_cls/C_box), float32."""
    B, C_in, H, W = x_nchw.shape
    C_cls = w_cls.shape[1]
    C_box = w_box.shape[1]
    C_tot = C_cls + C_box
    HW = H * W

    # Pure reshape (no data movement): keep NCHW layout, flatten spatial dims.
    # Stream x (and weights) in compute_dtype; accumulation stays f32 in the kernel.
    x_flat = x_nchw.reshape(B, C_in, HW).astype(compute_dtype)
    # Fused, pre-transposed weights -> canonical (M, K) x (K, N) MXU matmul, no
    # in-kernel transpose of the big x tile.
    w_t = jnp.concatenate([w_cls, w_box], axis=1).T.astype(compute_dtype)   # (C_tot, C_in)
    bias = jnp.concatenate([b_cls, b_box]).reshape(C_tot, 1).astype(jnp.float32)

    in_itemsize = jnp.dtype(compute_dtype).itemsize
    t_hw = _pick_hw_tile(HW, C_in, C_tot, B, in_itemsize,
                         max_tile=max_hw_tile,
                         vmem_budget_bytes=vmem_budget_bytes,
                         min_programs=min_programs)
    grid = (B, pl.cdiv(HW, t_hw))

    out_flat = pl.pallas_call(
        _single_head_kernel,
        out_shape=jax.ShapeDtypeStruct((B, C_tot, HW), jnp.float32),
        grid_spec=pltpu.PrefetchScalarGridSpec(
            num_scalar_prefetch=0,
            grid=grid,
            in_specs=[
                pl.BlockSpec((None, C_in, t_hw), lambda b, j: (b, 0, j)),
                pl.BlockSpec((C_tot, C_in), lambda b, j: (0, 0)),
                pl.BlockSpec((C_tot, 1), lambda b, j: (0, 0)),
            ],
            out_specs=pl.BlockSpec((None, C_tot, t_hw), lambda b, j: (b, 0, j)),
        ),
        compiler_params=pltpu.CompilerParams(
            dimension_semantics=("parallel", "parallel"),
            vmem_limit_bytes=32 * 1024 * 1024,   # blocks budgeted to ~24 MiB; safe on v5e/v6e/v7x
        ),
    )(x_flat, w_t, bias)

    # Tiny (<=20-channel) layout fixup + head split in XLA: this is the
    # permute(0, 2, 3, 1) of the PyTorch forward.
    out_nhwc = jnp.transpose(out_flat.reshape(B, C_tot, H, W), (0, 2, 3, 1))
    cls_preds = out_nhwc[..., :C_cls]
    box_preds = out_nhwc[..., C_cls:]
    return cls_preds, box_preds


if __name__ == "__main__":
    # Small synthetic configuration consistent with SingleHead.__init__:
    #   input_channels=32, num_class=3, num_anchors_per_location=2, code_size=7
    #   separate_reg_config=None, USE_DIRECTION_CLASSIFIER=None, USE_MULTIHEAD=False
    B, C_in, H, W = 2, 32, 16, 16
    num_class = 3
    num_anchors = 2
    code_size = 7
    C_cls = num_anchors * num_class      # 6
    C_box = num_anchors * code_size      # 14

    key = jax.random.PRNGKey(0)
    kx, kwc, kwb, kbb, kx2 = jax.random.split(key, 5)

    x = jax.random.normal(kx, (B, C_in, H, W), dtype=jnp.float32)

    # PyTorch 1x1 conv weight (C_out, C_in, 1, 1) stored here already transposed
    # to (C_in, C_out) for the channel-contraction matmul.
    w_cls = 0.05 * jax.random.normal(kwc, (C_in, C_cls), dtype=jnp.float32)
    pi = 0.01
    b_cls = jnp.full((C_cls,), -np.log((1 - pi) / pi), dtype=jnp.float32)  # init_weights()
    w_box = 0.05 * jax.random.normal(kwb, (C_in, C_box), dtype=jnp.float32)
    b_box = 0.01 * jax.random.normal(kbb, (C_box,), dtype=jnp.float32)

    def reference(xin):
        x_nhwc = jnp.transpose(xin, (0, 2, 3, 1))
        rc = jnp.einsum("bhwc,co->bhwo", x_nhwc, w_cls) + b_cls
        rb = jnp.einsum("bhwc,co->bhwo", x_nhwc, w_box) + b_box
        return rc, rb

    # 1) Default bf16-streamed path (f32 accumulation) -- loose tolerance.
    cls_preds, box_preds = single_head_forward(x, w_cls, b_cls, w_box, b_box)
    jax.block_until_ready((cls_preds, box_preds))
    ref_cls, ref_box = reference(x)
    np.testing.assert_allclose(np.asarray(cls_preds), np.asarray(ref_cls), rtol=3e-2, atol=3e-2)
    np.testing.assert_allclose(np.asarray(box_preds), np.asarray(ref_box), rtol=3e-2, atol=3e-2)
    assert cls_preds.shape == (B, H, W, C_cls)
    assert box_preds.shape == (B, H, W, C_box)

    # 2) Full-f32 path -- tight tolerance (bit-faithful to the PyTorch 1x1 convs).
    cls_f32, box_f32 = single_head_forward(x, w_cls, b_cls, w_box, b_box,
                                           compute_dtype=jnp.float32)
    jax.block_until_ready((cls_f32, box_f32))
    np.testing.assert_allclose(np.asarray(cls_f32), np.asarray(ref_cls), rtol=1e-5, atol=1e-4)
    np.testing.assert_allclose(np.asarray(box_f32), np.asarray(ref_box), rtol=1e-5, atol=1e-4)

    # 3) Boundary-tile test: HW = 300 with a 256-wide spatial tile -> partial last
    #    block (masked output writeback, stale OOB columns in the input block).
    Hb, Wb = 10, 30
    xb = jax.random.normal(kx2, (B, C_in, Hb, Wb), dtype=jnp.float32)
    cls_b, box_b = single_head_forward(xb, w_cls, b_cls, w_box, b_box,
                                       compute_dtype=jnp.float32, max_hw_tile=256)
    jax.block_until_ready((cls_b, box_b))
    refb_cls, refb_box = reference(xb)
    np.testing.assert_allclose(np.asarray(cls_b), np.asarray(refb_cls), rtol=1e-5, atol=1e-4)
    np.testing.assert_allclose(np.asarray(box_b), np.asarray(refb_box), rtol=1e-5, atol=1e-4)

    print("KERNEL_OK")
</pallas_src>

<mosaic_0001>
module attributes {stable_mosaic.version = 11 : i64} {
  func.func @_single_head_kernel(%arg0: i32, %arg1: i32, %arg2: memref<1x32x256xbf16, #tpu.memory_space<vmem>>, %arg3: memref<20x32xbf16, #tpu.memory_space<vmem>>, %arg4: memref<20x1xf32, #tpu.memory_space<vmem>>, %arg5: memref<1x20x256xf32, #tpu.memory_space<vmem>>) attributes {dimension_semantics = [#tpu.dimension_semantics<parallel>, #tpu.dimension_semantics<parallel>], iteration_bounds = array<i64: 2, 1>, scalar_prefetch = 0 : i64, scratch_operands = 0 : i64, tpu.core_type = #tpu.core_type<tc>, window_params = [{transform_indices = @transform_0, window_bounds = array<i64: 1, 32, 256>}, {pipeline_mode = #tpu.pipeline_mode<synchronous>, transform_indices = @transform_1, window_bounds = array<i64: 20, 32>}, {pipeline_mode = #tpu.pipeline_mode<synchronous>, transform_indices = @transform_2, window_bounds = array<i64: 20, 1>}, {transform_indices = @transform_3, window_bounds = array<i64: 1, 20, 256>}]} {
    %c0 = arith.constant 0 : index
    %c0_0 = arith.constant 0 : index
    %0 = vector.load %arg3[%c0, %c0_0] : memref<20x32xbf16, #tpu.memory_space<vmem>>, vector<20x32xbf16>
    %c0_1 = arith.constant 0 : index
    %c0_2 = arith.constant 0 : index
    %c0_3 = arith.constant 0 : index
    %1 = vector.load %arg2[%c0_1, %c0_2, %c0_3] : memref<1x32x256xbf16, #tpu.memory_space<vmem>>, vector<1x32x256xbf16>
    %2 = vector.shape_cast %1 : vector<1x32x256xbf16> to vector<32x256xbf16>
    %cst = arith.constant dense<0.000000e+00> : vector<20x256xf32>
    %3 = tpu.matmul %0, %2, %cst {dimension_numbers = #tpu.dot_dimension_numbers<[1], [0], [0], [1], [0, 0, 1, 1], [], []>} : vector<20x32xbf16>, vector<32x256xbf16>, vector<20x256xf32> -> vector<20x256xf32>
    %c0_4 = arith.constant 0 : index
    %c0_5 = arith.constant 0 : index
    %4 = vector.load %arg4[%c0_4, %c0_5] : memref<20x1xf32, #tpu.memory_space<vmem>>, vector<20x1xf32>
    %5 = vector.broadcast %4 : vector<20x1xf32> to vector<20x256xf32>
    %6 = arith.addf %3, %5 : vector<20x256xf32>
    %c0_6 = arith.constant 0 : index
    %c0_7 = arith.constant 0 : index
    %c0_8 = arith.constant 0 : index
    %7 = vector.load %arg5[%c0_6, %c0_7, %c0_8] : memref<1x20x256xf32, #tpu.memory_space<vmem>>, vector<1x20x256xf32>
    %8 = vector.shape_cast %7 : vector<1x20x256xf32> to vector<20x256xf32>
    %9 = vector.shape_cast %6 : vector<20x256xf32> to vector<1x20x256xf32>
    tpu.vector_store %arg5[%c0_6, %c0_7, %c0_8], %9 {strides = array<i32>} : memref<1x20x256xf32, #tpu.memory_space<vmem>>, vector<1x20x256xf32>,
    return
  }
  func.func @transform_0(%arg0: i32, %arg1: i32) -> (i32, i32, i32) {
    %c0_i32 = arith.constant 0 : i32
    %c0_i32_0 = arith.constant 0 : i32
    return %arg0, %c0_i32, %arg1 : i32, i32, i32
  }
  func.func @transform_1(%arg0: i32, %arg1: i32) -> (i32, i32) {
    %c0_i32 = arith.constant 0 : i32
    %c0_i32_0 = arith.constant 0 : i32
    %c0_i32_1 = arith.constant 0 : i32
    return %c0_i32, %c0_i32_0 : i32, i32
  }
  func.func @transform_2(%arg0: i32, %arg1: i32) -> (i32, i32) {
    %c0_i32 = arith.constant 0 : i32
    %c0_i32_0 = arith.constant 0 : i32
    %c0_i32_1 = arith.constant 0 : i32
    return %c0_i32, %c0_i32_0 : i32, i32
  }
  func.func @transform_3(%arg0: i32, %arg1: i32) -> (i32, i32, i32) {
    %c0_i32 = arith.constant 0 : i32
    %c0_i32_0 = arith.constant 0 : i32
    return %arg0, %c0_i32, %arg1 : i32, i32, i32
  }
}

</mosaic_0001>

<llo_original>
// kernel: tpu_custom_call.1
$region0: #{tpu_custom_call.1}
  #allocation0 [shape = 'u32[]', space=smem, size = 0x4, offset = 0x4, fixed_abs, tag = 'smem constant byte address 0x4 - core index']
  #allocation1 [shape = 'u32[72,128]{1,0:T(1,128)}', space=vmem, size = 0x9000, scoped, tag = 'internal scratch']
  %s0 = inlined_call_operand.hbm [shape: bf16[2,32,256], index: 0, kind: input, shape index: {}]
  %s1 = inlined_call_operand.vmem [shape: bf16[20,32], index: 1, kind: input, shape index: {}]
  %s2 = inlined_call_operand.vmem [shape: f32[20,1], index: 2, kind: input, shape index: {}]
  %s3 = inlined_call_operand.vmem [shape: f32[2,20,256], index: 3, kind: output, shape index: {}]
  %s4 = sld [smem:[#allocation0]]
  $region49: #{tpu_custom_call.1} parent=0
    _
  %s6 = ssub.s32 1, %s4
  %s7 = scalar_select 0, %s6, %s4
  $region1: #{tpu_custom_call.1} parent=0
    #allocation2 [shape = 'u8[32768]{0}', space=vmem, size = 0x8000, scoped, tag = 'input window, operand 0']
    #allocation3 [shape = 's32[2]{0}', space=sflag, size = 0x8, scoped, tag = 'scoped memory for tpu_custom_call.1']
    %8 = vsyncpa [#allocation3], 0
    %s9 = scalar_lea.sflag [#allocation3], 1
    %10 = vsyncpa %s9, 0
    loop: start=0, step=1, limit=4
    $region2: #{tpu_custom_call.1} parent=1 // loop_pre_header
      _
    $region3: #{tpu_custom_call.1} parent=1 // loop_header
      %s12 = sphi 0, %s16
      %p13 = scmp.ge.s32.totalorder %s12, 4
      %s19 = sphi 0, %s31
      %s20 = sphi 0, %s27
      %s21 = sphi 0, %s19
      %s22 = sphi 0, %s20
      %s23 = sphi 0, %s21
      %s24 = sphi 0, %s22
      %s36 = sphi 0, %s38
      %s39 = sphi 0, %s36
      %s40 = sphi 0, %s39
      %s56 = sphi 0, %s40
      %s60 = sphi 0, %s60
      %s62 = sphi 0, %s60
      %s63 = sphi 0, %s62
      %s77 = sphi 0, %s63
      %s81 = sphi 0, %s81
      %s83 = sphi 0, %s81
      %s84 = sphi 0, %s83
      %s98 = sphi 0, %s84
      %s106 = sphi 0, %s108
      %s109 = sphi 0, %s106
      %s110 = sphi 0, %s109
      %s126 = sphi 0, %s110
    $region4: #{tpu_custom_call.1} parent=1 // loop_header_branch
      %15 = sbr.rel (%p13) target = $region8
    $region5: #{tpu_custom_call.1} parent=1 // loop_body
      %s17 = ssub.s32 %s12, 1
      %s18 = ssub.s32 %s12, 2
      %s25 = sadd.s32 1, %s20
      %p26 = scmp.ge.s32.totalorder %s25, 1
      %s27 = scalar_select %p26, 0, %s25
      %s28 = sadd.s32 1, %s19
      %s29 = scalar_select %p26, %s28, %s19
      %p30 = scmp.ge.s32.totalorder %s29, 2
      %s31 = scalar_select %p30, 0, %s29
      %s32 = ssub.s32 %s19, %s31
      %s33 = ssub.s32 %s20, %s27
      %s34 = sor.u32 %s32, %s33
      %p35 = scmp.eq.s32.totalorder %s34, 0
      %s37 = sadd.s32 %s36, 1
      %s38 = scalar_select %p35, %s36, %s37
      %p41 = pneg %p35
      %p42 = scmp.eq.s32.totalorder %s12, 1
      %p43 = por %p41, %p42
      %p44 = scmp.ne.s32.totalorder %s36, %s39
      %p45 = scmp.eq.s32.totalorder %s12, 0
      %p46 = por %p44, %p45
      %p47 = scmp.ne.s32.totalorder %s36, %s39
      %p48 = scmp.eq.s32.totalorder %s17, 1
      %p49 = por %p47, %p48
      %p50 = scmp.ne.s32.totalorder %s39, %s40
      %p51 = scmp.eq.s32.totalorder %s17, 0
      %p52 = por %p50, %p51
      %p53 = scmp.ne.s32.totalorder %s39, %s40
      %p54 = scmp.eq.s32.totalorder %s18, 1
      %p55 = por %p53, %p54
      %p57 = scmp.ne.s32.totalorder %s40, %s56
      %p58 = scmp.eq.s32.totalorder %s18, 0
      %p59 = por %p57, %p58
      %s61 = sadd.s32 %s60, 1
      %p64 = scmp.eq.s32.totalorder %s12, 1
      %p65 = scmp.ne.s32.totalorder %s60, %s62
      %p66 = scmp.eq.s32.totalorder %s12, 0
      %p67 = por %p65, %p66
      %p68 = scmp.ne.s32.totalorder %s60, %s62
      %p69 = scmp.eq.s32.totalorder %s17, 1
      %p70 = por %p68, %p69
      %p71 = scmp.ne.s32.totalorder %s62, %s63
      %p72 = scmp.eq.s32.totalorder %s17, 0
      %p73 = por %p71, %p72
      %p74 = scmp.ne.s32.totalorder %s62, %s63
      %p75 = scmp.eq.s32.totalorder %s18, 1
      %p76 = por %p74, %p75
      %p78 = scmp.ne.s32.totalorder %s63, %s77
      %p79 = scmp.eq.s32.totalorder %s18, 0
      %p80 = por %p78, %p79
      %s82 = sadd.s32 %s81, 1
      %p85 = scmp.eq.s32.totalorder %s12, 1
      %p86 = scmp.ne.s32.totalorder %s81, %s83
      %p87 = scmp.eq.s32.totalorder %s12, 0
      %p88 = por %p86, %p87
      %p89 = scmp.ne.s32.totalorder %s81, %s83
      %p90 = scmp.eq.s32.totalorder %s17, 1
      %p91 = por %p89, %p90
      %p92 = scmp.ne.s32.totalorder %s83, %s84
      %p93 = scmp.eq.s32.totalorder %s17, 0
      %p94 = por %p92, %p93
      %p95 = scmp.ne.s32.totalorder %s83, %s84
      %p96 = scmp.eq.s32.totalorder %s18, 1
      %p97 = por %p95, %p96
      %p99 = scmp.ne.s32.totalorder %s84, %s98
      %p100 = scmp.eq.s32.totalorder %s18, 0
      %p101 = por %p99, %p100
      %s102 = ssub.s32 %s19, %s31
      %s103 = ssub.s32 %s20, %s27
      %s104 = sor.u32 %s102, %s103
      %p105 = scmp.eq.s32.totalorder %s104, 0
      %s107 = sadd.s32 %s106, 1
      %s108 = scalar_select %p105, %s106, %s107
      %p111 = pneg %p105
      %p112 = scmp.eq.s32.totalorder %s12, 1
      %p113 = por %p111, %p112
      %p114 = scmp.ne.s32.totalorder %s106, %s109
      %p115 = scmp.eq.s32.totalorder %s12, 0
      %p116 = por %p114, %p115
      %p117 = scmp.ne.s32.totalorder %s106, %s109
      %p118 = scmp.eq.s32.totalorder %s17, 1
      %p119 = por %p117, %p118
      %p120 = scmp.ne.s32.totalorder %s109, %s110
      %p121 = scmp.eq.s32.totalorder %s17, 0
      %p122 = por %p120, %p121
      %p123 = scmp.ne.s32.totalorder %s109, %s110
      %p124 = scmp.eq.s32.totalorder %s18, 1
      %p125 = por %p123, %p124
      %p127 = scmp.ne.s32.totalorder %s110, %s126
      %p128 = scmp.eq.s32.totalorder %s18, 0
      %p129 = por %p127, %p128
      %p130 = scmp.le.s32.totalorder 1, %s12
      %p131 = scmp.lt.s32.totalorder %s12, 3
      %p132 = pnand %p130, %p131
      %p133 = pneg %p132
      // Predicated region
      $region9: #{tpu_custom_call.1} parent=5 // pred_check
        _
      $region10: #{tpu_custom_call.1} parent=5 // pred_check_branch
        %135 = sbr.rel (%p132) target = $region12
      $region11: #{tpu_custom_call.1} parent=5 // pred_region
        %s136 = ssub.s32 %s12, 1
        // Predicated region
        $region13: #{tpu_custom_call.1} parent=11 // pred_check
          %p137 = pneg %p73
        $region14: #{tpu_custom_call.1} parent=11 // pred_check_branch
          %139 = sbr.rel (%p137) target = $region16
        $region15: #{tpu_custom_call.1} parent=11 // pred_region
          _
        $region16: #{tpu_custom_call.1} parent=11 // pred_fallthru
          _
        // Predicated region
        $region17: #{tpu_custom_call.1} parent=11 // pred_check
          %p140 = pneg %p94
        $region18: #{tpu_custom_call.1} parent=11 // pred_check_branch
          %142 = sbr.rel (%p140) target = $region20
        $region19: #{tpu_custom_call.1} parent=11 // pred_region
          _
        $region20: #{tpu_custom_call.1} parent=11 // pred_fallthru
          _
      $region12: #{tpu_custom_call.1} parent=5 // pred_fallthru
        _
      %p143 = scmp.lt.s32.totalorder %s12, 2
      // Predicated region
      $region21: #{tpu_custom_call.1} parent=5 // pred_check
        %p144 = pneg %p143
      $region22: #{tpu_custom_call.1} parent=5 // pred_check_branch
        %146 = sbr.rel (%p144) target = $region24
      $region23: #{tpu_custom_call.1} parent=5 // pred_region
        // Predicated region
        $region25: #{tpu_custom_call.1} parent=23 // pred_check
          %p147 = pneg %p46
        $region26: #{tpu_custom_call.1} parent=23 // pred_check_branch
          %149 = sbr.rel (%p147) target = $region28
        $region27: #{tpu_custom_call.1} parent=23 // pred_region
          %s150 = sand.u32 %s36, 1
          %s151 = scalar_lea.sflag [#allocation3], %s150
          %s152 = sand.u32 %s36, 1
          %s153 = smul.addr %s152, 32
          %s154 = scalar_lea.vmem [#allocation2], %s153
          %s155 = smul.u32 2, %s20
          %157 = vsyncadd %s151, 0
          %s158 = smul.addr %s19, 8
          %s159 = sadd.s32 %s155, %s158
          %s160 = smul.addr %s159, 4
          %s161 = scalar_lea.hbm %s0, %s160
          %s162 = sshll.u32 %s161, 4
          %s163 = int_to_ptr.hbm [resolvable:$true] %s162
          %s164 = sshll.u32 %s154, 4
          %s165 = int_to_ptr.vmem [resolvable:$true] %s164
          %170 = dma.hbm_to_vmem [thread:$0]  %s163, 512, %s165, %s151, 128, 128, 8
        $region28: #{tpu_custom_call.1} parent=23 // pred_fallthru
          _
      $region24: #{tpu_custom_call.1} parent=5 // pred_fallthru
        _
      %p171 = scmp.le.s32.totalorder 1, %s12
      %p172 = scmp.lt.s32.totalorder %s12, 3
      %p173 = pnand %p171, %p172
      %p174 = pneg %p173
      // Predicated region
      $region29: #{tpu_custom_call.1} parent=5 // pred_check
        _
      $region30: #{tpu_custom_call.1} parent=5 // pred_check_branch
        %176 = sbr.rel (%p173) target = $region32
      $region31: #{tpu_custom_call.1} parent=5 // pred_region
        %s177 = ssub.s32 %s12, 1
        %s178 = sand.u32 %s39, 1
        %s179 = scalar_lea.sflag [#allocation3], %s178
        %s180 = sand.u32 %s39, 1
        %s181 = smul.addr %s180, 32
        %s182 = scalar_lea.vmem [#allocation2], %s181
        // Predicated region
        $region33: #{tpu_custom_call.1} parent=31 // pred_check
          %p183 = pneg %p52
        $region34: #{tpu_custom_call.1} parent=31 // pred_check_branch
          %185 = sbr.rel (%p183) target = $region36
        $region35: #{tpu_custom_call.1} parent=31 // pred_region
          %187 = dma.done %s179, 512
        $region36: #{tpu_custom_call.1} parent=31 // pred_fallthru
          _
        %s188 = sand.u32 %s39, 1
        %s189 = scalar_lea.sflag [#allocation3], %s188
        %s190 = sand.u32 %s39, 1
        %s191 = smul.addr %s190, 32
        %s192 = scalar_lea.vmem [#allocation2], %s191
        %p193 = pneg %p52
        %p194 = pneg %p49
        %p195 = pneg %p73
        %p196 = pneg %p70
        %p197 = pneg %p94
        %p198 = pneg %p91
        %p199 = pneg %p122
        %p200 = pneg %p119
        %s201 = smul.u32 2, %s22
        %p202 = scmp.lt.s32.totalorder %s21, 1
        %s203 = scalar_select %p202, %s21, 1
        %p204 = scmp.lt.s32.totalorder %s201, 1
        %s205 = scalar_select %p204, %s201, 1
        %s206 = smul.addr %s203, 6
        %s207 = sadd.s32 %s205, %s206
        %s208 = smul.addr %s207, 8
        %s209 = scalar_lea.vmem %s3, %s208
        %s210 = smul.u32 2, %s22
        %s211 = smul.u32 2, %s22
        %p212 = scmp.lt.s32.totalorder %s21, 1
        %s213 = scalar_select %p212, %s21, 1
        %p214 = scmp.lt.s32.totalorder %s211, 1
        %s215 = scalar_select %p214, %s211, 1
        %s216 = smul.addr %s213, 6
        %s217 = sadd.s32 %s215, %s216
        %s218 = smul.addr %s217, 8
        %s219 = scalar_lea.vmem %s3, %s218
        %s220 = smul.u32 2, %s22
        %v222 = vld [vmem:[%s1] sm:$0xf]
        %v223 = vld [vmem:[%s1 + $0x4] sm:$0xf]
        %v224 = vld [vmem:[%s1 + $0x8] sm:$0x3]
        %v225 = vld [vmem:[%s182] sm:$0xff]
        %v226 = vld [vmem:[%s182 + $0x8] sm:$0xff]
        %v227 = vld [vmem:[%s182 + $0x10] sm:$0xff]
        %v228 = vld [vmem:[%s182 + $0x18] sm:$0xff]
        %v229 = vld [vmem:[%s2] sm:$0xff]
        %v230 = vld [vmem:[%s2 + $0x8] sm:$0xff]
        %v231 = vld [vmem:[%s2 + $0x10] sm:$0xf]
        %233 = vset.pattern.permute.xlu0 0
        %234 = vperm.xlu0 %233, %v229
        %v235 = vpop.permute.xlu0 %234
        %238 = vset.pattern.permute.xlu0 0
        %239 = vperm.xlu0 %238, %v230
        %v240 = vpop.permute.xlu0 %239
        %243 = vset.pattern.permute.xlu0 0
        %244 = vperm.xlu0 %243, %v231
        %v245 = vpop.permute.xlu0 %244
        %v250 = vunpack.c.l.b16 %v222
        %v251 = vunpack.c.l.b16 %v223
        %v252 = vunpack.c.l.b16 %v224
        %v253 = vpack.c.b16 %v251, %v250
        %v254 = vpack.c.b16 %v252, %v252
        %v259 = vunpack.c.l.b16 %v225
        %v260 = vunpack.c.h.b16 %v225
        %v261 = vunpack.c.l.b16 %v226
        %v262 = vunpack.c.h.b16 %v226
        %v263 = vunpack.c.l.b16 %v227
        %v264 = vunpack.c.h.b16 %v227
        %v265 = vunpack.c.l.b16 %v228
        %v266 = vunpack.c.h.b16 %v228
        %v267 = vpack.c.b16 %v261, %v259
        %v268 = vpack.c.b16 %v262, %v260
        %v269 = vpack.c.b16 %v265, %v263
        %v270 = vpack.c.b16 %v266, %v264
        %vm275 = vcmask 261120
        %v277 = vsel %vm275, %v253, 0
        %v280 = vsel %vm275, %v254, 0
        %282 = vmatpush.bf16.msra.mxu0 0
        %283 = vmatpush.bf16.msra.mxu0 0
        %284 = vmatpush.bf16.msra.mxu0 0
        %285 = vmatpush.bf16.msra.mxu0 0
        %286 = vmatpush.bf16.msra.mxu0 0
        %287 = vmatpush.bf16.msra.mxu0 0
        %288 = vmatpush.bf16.msra.mxu0 %v269
        %289 = vmatpush.bf16.msra.mxu0 %v267
        %290 = vmatmul.bf16.gmra.mxu0 %v277
        %v291 = vpop.f32.mrf.mxu0
        %v292 = vadd.f32 %v235, %v291
        %v293 = vpop.f32.mrf.mxu0
        %v294 = vadd.f32 %v240, %v293
        %295 = vmatmul.bf16.gmra.mxu0 %v280
        %v296 = vpop.f32.mrf.mxu0
        %v297 = vadd.f32 %v245, %v296
        %v298 = vpop.f32.mrf.mxu0
        %299 = vdwg.mxu0
        %300 = vmatpush.bf16.msra.mxu0 0
        %301 = vmatpush.bf16.msra.mxu0 0
        %302 = vmatpush.bf16.msra.mxu0 0
        %303 = vmatpush.bf16.msra.mxu0 0
        %304 = vmatpush.bf16.msra.mxu0 0
        %305 = vmatpush.bf16.msra.mxu0 0
        %306 = vmatpush.bf16.msra.mxu0 %v270
        %307 = vmatpush.bf16.msra.mxu0 %v268
        %308 = vmatmul.bf16.gmra.mxu0 %v277
        %v309 = vpop.f32.mrf.mxu0
        %v310 = vadd.f32 %v235, %v309
        %v311 = vpop.f32.mrf.mxu0
        %v312 = vadd.f32 %v240, %v311
        %313 = vmatmul.bf16.gmra.mxu0 %v280
        %v314 = vpop.f32.mrf.mxu0
        %v315 = vadd.f32 %v245, %v314
        %v316 = vpop.f32.mrf.mxu0
        %317 = vdwg.mxu0
        %318 = vst [vmem:[%s219] sm:$0xff] %v292
        %319 = vst [vmem:[%s219 + $0x8] sm:$0xff] %v310
        %320 = vst [vmem:[%s219 + $0x10] sm:$0xff] %v294
        %321 = vst [vmem:[%s219 + $0x18] sm:$0xff] %v312
        %322 = vst [vmem:[%s219 + $0x20] sm:$0xf] %v297
        %323 = vst [vmem:[%s219 + $0x28] sm:$0xf] %v315
        %s324 = smul.u32 2, %s22
        %p325 = scmp.lt.s32.totalorder %s21, 1
        %s326 = scalar_select %p325, %s21, 1
        %p327 = scmp.lt.s32.totalorder %s324, 1
        %s328 = scalar_select %p327, %s324, 1
        %s329 = smul.addr %s326, 6
        %s330 = sadd.s32 %s328, %s329
        %s331 = smul.addr %s330, 8
        %s332 = scalar_lea.vmem %s3, %s331
        // Predicated region
        $region37: #{tpu_custom_call.1} parent=31 // pred_check
          %p333 = pneg %p119
        $region38: #{tpu_custom_call.1} parent=31 // pred_check_branch
          %335 = sbr.rel (%p333) target = $region40
        $region39: #{tpu_custom_call.1} parent=31 // pred_region
          %s336 = smul.u32 2, %s22
        $region40: #{tpu_custom_call.1} parent=31 // pred_fallthru
          _
      $region32: #{tpu_custom_call.1} parent=5 // pred_fallthru
        _
      %p337 = scmp.le.s32.totalorder 2, %s12
      // Predicated region
      $region41: #{tpu_custom_call.1} parent=5 // pred_check
        %p338 = pneg %p337
      $region42: #{tpu_custom_call.1} parent=5 // pred_check_branch
        %340 = sbr.rel (%p338) target = $region44
      $region43: #{tpu_custom_call.1} parent=5 // pred_region
        %s341 = ssub.s32 %s12, 2
        // Predicated region
        $region45: #{tpu_custom_call.1} parent=43 // pred_check
          %p342 = pneg %p125
        $region46: #{tpu_custom_call.1} parent=43 // pred_check_branch
          %344 = sbr.rel (%p342) target = $region48
        $region47: #{tpu_custom_call.1} parent=43 // pred_region
          %s345 = smul.u32 2, %s24
          %p346 = scmp.lt.s32.totalorder %s23, 1
          %s347 = scalar_select %p346, %s23, 1
          %p348 = scmp.lt.s32.totalorder %s345, 1
          %s349 = scalar_select %p348, %s345, 1
          %s350 = smul.addr %s347, 6
          %s351 = sadd.s32 %s349, %s350
          %s352 = smul.addr %s351, 8
          %s353 = scalar_lea.vmem %s3, %s352
        $region48: #{tpu_custom_call.1} parent=43 // pred_fallthru
          _
      $region44: #{tpu_custom_call.1} parent=5 // pred_fallthru
        _
    $region6: #{tpu_custom_call.1} parent=1 // loop_footer
      %s16 = sadd.s32 1, %s12
    $region7: #{tpu_custom_call.1} parent=1 // loop_footer_branch
      %11 = sbr.rel target = $region3
    $region8: #{tpu_custom_call.1} parent=1 // loop_exit
      _
    %354 = vsyncpa [#allocation3], 1
    %s355 = scalar_lea.sflag [#allocation3], 1
    %356 = vsyncpa %s355, 1

</llo_original>
